<compile_context>
chip_gen: v5e
topology: v5e:2x2
jax: 0.10.0
libtpu: 0.0.40
codegen_flags: <defaults>
</compile_context>

<pallas_src>
import functools
import math

import jax
import jax.numpy as jnp
from jax.experimental import pallas as pl
from jax.experimental.pallas import tpu as pltpu


def _mhsa_kernel(x_ref, wqkv_ref, wc_ref, o_ref, *, heads, bt, seq):
    """One grid step = `bt` whole sequences, flattened to bt*seq MXU rows.

    x_ref    : [bt*seq, E]   bf16 activations (batch/seq flattened in wrapper)
    wqkv_ref : [E, 3*h*E]    bf16 fused Q|K|V projection (1/sqrt(E) folded into Q)
    wc_ref   : [h*E, E]      bf16 combined (output) projection
    o_ref    : [bt*seq, E]   output block (original activation dtype)
    """
    rows, E = x_ref.shape
    hE = heads * E

    # Fused Q|K|V projection: one wide lane-dense matmul (N = 3*h*E), f32 MXU
    # accumulation, then a single downcast to bf16.
    qkv = jnp.dot(x_ref[...], wqkv_ref[...],
                  preferred_element_type=jnp.float32).astype(jnp.bfloat16)   # [rows, 3hE]

    def head_batched(base):
        # [rows, hE] slab -> [heads*bt, seq, E]. The per-head slices are the
        # unavoidable lanes->batch relayout; all matmuls below are then batched.
        parts = [qkv[:, base + hd * E: base + (hd + 1) * E].reshape(bt, seq, E)
                 for hd in range(heads)]
        return jnp.concatenate(parts, axis=0)

    qg = head_batched(0)          # 1/sqrt(E) already folded into wq in the wrapper
    kg = head_batched(hE)
    vg = head_batched(2 * hE)

    # ONE batched QK^T over all (head, batch) groups.
    s = jnp.einsum('gqe,gke->gqk', qg, kg,
                   preferred_element_type=jnp.float32)                        # [G, S, S] f32

    # Numerically-stable softmax in f32; row normalization deferred past PV.
    # TODO(synk): on v6e/v7x the exp could run in bf16 to halve [S,S]-tile
    # traffic; kept f32 for v5e compatibility and accuracy headroom.
    s = s - jnp.max(s, axis=-1, keepdims=True)
    p = jnp.exp(s)
    l = jnp.sum(p, axis=-1, keepdims=True)                                    # [G, S, 1]

    # ONE batched PV matmul, then normalize the [G,S,E] result instead of the
    # [G,S,S] probabilities (S/E x less VPU work at long S).
    o = jnp.einsum('gqk,gke->gqe', p.astype(jnp.bfloat16), vg,
                   preferred_element_type=jnp.float32)                        # [G, S, E] f32
    o = o * pl.reciprocal(l, approx=True)

    # Heads back into lanes -> lane-dense [rows, hE], then ONE combined
    # projection with contraction K = hE.
    cat = jnp.concatenate(
        [o[hd * bt:(hd + 1) * bt].reshape(rows, E) for hd in range(heads)],
        axis=-1).astype(jnp.bfloat16)                                         # [rows, hE]
    o_ref[...] = jnp.dot(cat, wc_ref[...],
                         preferred_element_type=jnp.float32).astype(o_ref.dtype)


def _pick_batch_tile(B, S):
    """Largest divisor Bt of B with Bt*S <= 256; prefer >=2 grid steps (v7x
    megacore) only when each step still presents >= 128 MXU rows."""
    max_bt = max(1, 256 // S)
    bt = 1
    for cand in range(min(B, max_bt), 0, -1):
        if B % cand == 0:
            bt = cand
            break
    if B // bt == 1 and B > 1:
        for cand in range(bt // 2, 0, -1):
            if B % cand == 0 and cand * S >= 128:
                bt = cand
                break
    return bt


def multi_head_self_attention(x, wq, wk, wv, wc, attn_heads):
    """x: [B, S, E]; wq/wk/wv: [E, h*E]; wc: [h*E, E]. Returns [B, S, E]."""
    B, S, E = x.shape
    h = attn_heads
    hE = h * E
    assert wq.shape == (E, hE) and wk.shape == (E, hE)
    assert wv.shape == (E, hE) and wc.shape == (hE, E)

    # Fold the 1/sqrt(E) scale into Wq (fuses with the bf16 cast) and fuse the
    # three projections into one lane-dense [E, 3*h*E] operand.
    scale = 1.0 / math.sqrt(E)
    wqkv_bf = jnp.concatenate([wq * scale, wk, wv], axis=1).astype(jnp.bfloat16)
    wc_bf = wc.astype(jnp.bfloat16)

    bt = _pick_batch_tile(B, S)
    rows = bt * S
    assert B % bt == 0

    # Flatten batch/seq in the wrapper (layout plumbing, not compute) so each
    # grid step presents bt*S rows to the MXU.
    x_bf = x.reshape(B * S, E).astype(jnp.bfloat16)

    kernel = functools.partial(_mhsa_kernel, heads=h, bt=bt, seq=S)

    out_flat = pl.pallas_call(
        kernel,
        out_shape=jax.ShapeDtypeStruct((B * S, E), x.dtype),
        grid_spec=pltpu.PrefetchScalarGridSpec(
            num_scalar_prefetch=0,
            grid=(B // bt,),
            in_specs=[
                pl.BlockSpec((rows, E), lambda i: (i, 0)),        # activations
                pl.BlockSpec((E, 3 * hE), lambda i: (0, 0)),      # fused W_qkv (fetched once)
                pl.BlockSpec((hE, E), lambda i: (0, 0)),          # W_combined (fetched once)
            ],
            out_specs=pl.BlockSpec((rows, E), lambda i: (i, 0)),
        ),
        compiler_params=pltpu.CompilerParams(
            dimension_semantics=("parallel",),
            # Above v5e's 16 MiB scoped default, safely below v7x's 64 MiB
            # physical VMEM. Re-derive when S / bt grow (see flash TODO).
            vmem_limit_bytes=32 * 1024 * 1024,
        ),
    )(x_bf, wqkv_bf, wc_bf)

    return out_flat.reshape(B, S, E)


def _reference_mhsa(x, wq, wk, wv, wc, h):
    """Pure-JAX f32 reference matching the PyTorch forward exactly."""
    B, S, E = x.shape
    q = (x @ wq).reshape(B, S, h, E).transpose(0, 2, 1, 3)
    k = (x @ wk).reshape(B, S, h, E).transpose(0, 2, 1, 3)
    v = (x @ wv).reshape(B, S, h, E).transpose(0, 2, 1, 3)
    dot = jnp.einsum("bhqe,bhke->bhqk", q, k) / math.sqrt(E)
    attn = jax.nn.softmax(dot, axis=-1)
    out = jnp.einsum("bhqk,bhke->bhqe", attn, v)
    out = out.transpose(0, 2, 1, 3).reshape(B, S, h * E)
    return out @ wc


if __name__ == "__main__":
    B, S, E, H = 2, 8, 32, 4

    key = jax.random.PRNGKey(0)
    kx, kq, kk, kv, kc = jax.random.split(key, 5)

    x = jax.random.normal(kx, (B, S, E), dtype=jnp.float32)
    init_scale = 1.0 / math.sqrt(E)
    wq = jax.random.uniform(kq, (E, H * E), jnp.float32, -init_scale, init_scale)
    wk = jax.random.uniform(kk, (E, H * E), jnp.float32, -init_scale, init_scale)
    wv = jax.random.uniform(kv, (E, H * E), jnp.float32, -init_scale, init_scale)
    wc = jax.random.uniform(kc, (H * E, E), jnp.float32, -init_scale, init_scale)

    out = multi_head_self_attention(x, wq, wk, wv, wc, attn_heads=H)
    out = jax.block_until_ready(out)

    ref = _reference_mhsa(x, wq, wk, wv, wc, H)
    assert out.shape == (B, S, E)
    # Tolerance covers bf16 MXU operands + approx EUP reciprocal vs the f32 ref.
    assert jnp.allclose(out, ref, atol=5e-2, rtol=5e-2), (
        f"max abs err = {jnp.max(jnp.abs(out - ref))}"
    )
    print("KERNEL_OK")
</pallas_src>

<mosaic_0001>
module attributes {stable_mosaic.version = 11 : i64} {
  func.func @_mhsa_kernel(%arg0: i32, %arg1: memref<16x32xbf16, #tpu.memory_space<vmem>>, %arg2: memref<32x384xbf16, #tpu.memory_space<vmem>>, %arg3: memref<128x32xbf16, #tpu.memory_space<vmem>>, %arg4: memref<16x32xf32, #tpu.memory_space<vmem>>) attributes {dimension_semantics = [#tpu.dimension_semantics<parallel>], iteration_bounds = array<i64: 1>, scalar_prefetch = 0 : i64, scratch_operands = 0 : i64, tpu.core_type = #tpu.core_type<tc>, window_params = [{transform_indices = @transform_0, window_bounds = array<i64: 16, 32>}, {pipeline_mode = #tpu.pipeline_mode<synchronous>, transform_indices = @transform_1, window_bounds = array<i64: 32, 384>}, {pipeline_mode = #tpu.pipeline_mode<synchronous>, transform_indices = @transform_2, window_bounds = array<i64: 128, 32>}, {transform_indices = @transform_3, window_bounds = array<i64: 16, 32>}]} {
    %c0 = arith.constant 0 : index
    %c0_0 = arith.constant 0 : index
    %0 = vector.load %arg1[%c0, %c0_0] : memref<16x32xbf16, #tpu.memory_space<vmem>>, vector<16x32xbf16>
    %c0_1 = arith.constant 0 : index
    %c0_2 = arith.constant 0 : index
    %1 = vector.load %arg2[%c0_1, %c0_2] : memref<32x384xbf16, #tpu.memory_space<vmem>>, vector<32x384xbf16>
    %cst = arith.constant dense<0.000000e+00> : vector<16x384xf32>
    %2 = tpu.matmul %0, %1, %cst {dimension_numbers = #tpu.dot_dimension_numbers<[1], [0], [0], [1], [0, 0, 1, 1], [], []>} : vector<16x32xbf16>, vector<32x384xbf16>, vector<16x384xf32> -> vector<16x384xf32>
    %3 = arith.truncf %2 : vector<16x384xf32> to vector<16x384xbf16>
    %4 = vector.extract_strided_slice %3 {offsets = [0, 0], sizes = [16, 32], strides = [1, 1]} : vector<16x384xbf16> to vector<16x32xbf16>
    %5 = vector.shape_cast %4 : vector<16x32xbf16> to vector<2x8x32xbf16>
    %6 = vector.extract_strided_slice %3 {offsets = [0, 32], sizes = [16, 32], strides = [1, 1]} : vector<16x384xbf16> to vector<16x32xbf16>
    %7 = vector.shape_cast %6 : vector<16x32xbf16> to vector<2x8x32xbf16>
    %8 = vector.extract_strided_slice %3 {offsets = [0, 64], sizes = [16, 32], strides = [1, 1]} : vector<16x384xbf16> to vector<16x32xbf16>
    %9 = vector.shape_cast %8 : vector<16x32xbf16> to vector<2x8x32xbf16>
    %10 = vector.extract_strided_slice %3 {offsets = [0, 96], sizes = [16, 32], strides = [1, 1]} : vector<16x384xbf16> to vector<16x32xbf16>
    %11 = vector.shape_cast %10 : vector<16x32xbf16> to vector<2x8x32xbf16>
    %12 = tpu.concatenate %5, %7, %9, %11 in 0 : vector<2x8x32xbf16>, vector<2x8x32xbf16>, vector<2x8x32xbf16>, vector<2x8x32xbf16> -> vector<8x8x32xbf16>
    %13 = vector.extract_strided_slice %3 {offsets = [0, 128], sizes = [16, 32], strides = [1, 1]} : vector<16x384xbf16> to vector<16x32xbf16>
    %14 = vector.shape_cast %13 : vector<16x32xbf16> to vector<2x8x32xbf16>
    %15 = vector.extract_strided_slice %3 {offsets = [0, 160], sizes = [16, 32], strides = [1, 1]} : vector<16x384xbf16> to vector<16x32xbf16>
    %16 = vector.shape_cast %15 : vector<16x32xbf16> to vector<2x8x32xbf16>
    %17 = vector.extract_strided_slice %3 {offsets = [0, 192], sizes = [16, 32], strides = [1, 1]} : vector<16x384xbf16> to vector<16x32xbf16>
    %18 = vector.shape_cast %17 : vector<16x32xbf16> to vector<2x8x32xbf16>
    %19 = vector.extract_strided_slice %3 {offsets = [0, 224], sizes = [16, 32], strides = [1, 1]} : vector<16x384xbf16> to vector<16x32xbf16>
    %20 = vector.shape_cast %19 : vector<16x32xbf16> to vector<2x8x32xbf16>
    %21 = tpu.concatenate %14, %16, %18, %20 in 0 : vector<2x8x32xbf16>, vector<2x8x32xbf16>, vector<2x8x32xbf16>, vector<2x8x32xbf16> -> vector<8x8x32xbf16>
    %22 = vector.extract_strided_slice %3 {offsets = [0, 256], sizes = [16, 32], strides = [1, 1]} : vector<16x384xbf16> to vector<16x32xbf16>
    %23 = vector.shape_cast %22 : vector<16x32xbf16> to vector<2x8x32xbf16>
    %24 = vector.extract_strided_slice %3 {offsets = [0, 288], sizes = [16, 32], strides = [1, 1]} : vector<16x384xbf16> to vector<16x32xbf16>
    %25 = vector.shape_cast %24 : vector<16x32xbf16> to vector<2x8x32xbf16>
    %26 = vector.extract_strided_slice %3 {offsets = [0, 320], sizes = [16, 32], strides = [1, 1]} : vector<16x384xbf16> to vector<16x32xbf16>
    %27 = vector.shape_cast %26 : vector<16x32xbf16> to vector<2x8x32xbf16>
    %28 = vector.extract_strided_slice %3 {offsets = [0, 352], sizes = [16, 32], strides = [1, 1]} : vector<16x384xbf16> to vector<16x32xbf16>
    %29 = vector.shape_cast %28 : vector<16x32xbf16> to vector<2x8x32xbf16>
    %30 = tpu.concatenate %23, %25, %27, %29 in 0 : vector<2x8x32xbf16>, vector<2x8x32xbf16>, vector<2x8x32xbf16>, vector<2x8x32xbf16> -> vector<8x8x32xbf16>
    "tpu.trace_start"() <{level = 10 : i32, message = "gqe,gke->gqk"}> : () -> ()
    %cst_3 = arith.constant dense<0.000000e+00> : vector<8x8x8xf32>
    %31 = tpu.matmul %12, %21, %cst_3 {dimension_numbers = #tpu.dot_dimension_numbers<[2], [2], [1], [1], [0, 0, 0, 1, 1, 1], [0], [0]>} : vector<8x8x32xbf16>, vector<8x8x32xbf16>, vector<8x8x8xf32> -> vector<8x8x8xf32>
    "tpu.trace_stop"() : () -> ()
    %cst_4 = arith.constant dense<0xFF800000> : vector<8x8xf32>
    %32 = vector.multi_reduction <maximumf>, %31, %cst_4 [2] : vector<8x8x8xf32> to vector<8x8xf32>
    %33 = vector.shape_cast %32 : vector<8x8xf32> to vector<8x8x1xf32>
    %34 = vector.broadcast %33 : vector<8x8x1xf32> to vector<8x8x8xf32>
    %35 = arith.subf %31, %34 : vector<8x8x8xf32>
    %36 = math.exp %35 : vector<8x8x8xf32>
    %cst_5 = arith.constant dense<0.000000e+00> : vector<8x8xf32>
    %37 = vector.multi_reduction <add>, %36, %cst_5 [2] : vector<8x8x8xf32> to vector<8x8xf32>
    %38 = vector.shape_cast %37 : vector<8x8xf32> to vector<8x8x1xf32>
    %39 = arith.truncf %36 : vector<8x8x8xf32> to vector<8x8x8xbf16>
    "tpu.trace_start"() <{level = 10 : i32, message = "gqk,gke->gqe"}> : () -> ()
    %cst_6 = arith.constant dense<0.000000e+00> : vector<8x8x32xf32>
    %40 = tpu.matmul %39, %30, %cst_6 {dimension_numbers = #tpu.dot_dimension_numbers<[2], [1], [1], [2], [0, 0, 0, 1, 1, 2], [0], [0]>} : vector<8x8x8xbf16>, vector<8x8x32xbf16>, vector<8x8x32xf32> -> vector<8x8x32xf32>
    "tpu.trace_stop"() : () -> ()
    %41 = tpu.reciprocal %38 {approx = true} : vector<8x8x1xf32> -> vector<8x8x1xf32>
    %42 = vector.broadcast %41 : vector<8x8x1xf32> to vector<8x8x32xf32>
    %43 = arith.mulf %40, %42 : vector<8x8x32xf32>
    %44 = vector.extract_strided_slice %43 {offsets = [0, 0, 0], sizes = [2, 8, 32], strides = [1, 1, 1]} : vector<8x8x32xf32> to vector<2x8x32xf32>
    %45 = vector.shape_cast %44 : vector<2x8x32xf32> to vector<16x32xf32>
    %46 = vector.extract_strided_slice %43 {offsets = [2, 0, 0], sizes = [2, 8, 32], strides = [1, 1, 1]} : vector<8x8x32xf32> to vector<2x8x32xf32>
    %47 = vector.shape_cast %46 : vector<2x8x32xf32> to vector<16x32xf32>
    %48 = vector.extract_strided_slice %43 {offsets = [4, 0, 0], sizes = [2, 8, 32], strides = [1, 1, 1]} : vector<8x8x32xf32> to vector<2x8x32xf32>
    %49 = vector.shape_cast %48 : vector<2x8x32xf32> to vector<16x32xf32>
    %50 = vector.extract_strided_slice %43 {offsets = [6, 0, 0], sizes = [2, 8, 32], strides = [1, 1, 1]} : vector<8x8x32xf32> to vector<2x8x32xf32>
    %51 = vector.shape_cast %50 : vector<2x8x32xf32> to vector<16x32xf32>
    %52 = tpu.concatenate %45, %47, %49, %51 in 1 : vector<16x32xf32>, vector<16x32xf32>, vector<16x32xf32>, vector<16x32xf32> -> vector<16x128xf32>
    %53 = arith.truncf %52 : vector<16x128xf32> to vector<16x128xbf16>
    %c0_7 = arith.constant 0 : index
    %c0_8 = arith.constant 0 : index
    %54 = vector.load %arg3[%c0_7, %c0_8] : memref<128x32xbf16, #tpu.memory_space<vmem>>, vector<128x32xbf16>
    %cst_9 = arith.constant dense<0.000000e+00> : vector<16x32xf32>
    %55 = tpu.matmul %53, %54, %cst_9 {dimension_numbers = #tpu.dot_dimension_numbers<[1], [0], [0], [1], [0, 0, 1, 1], [], []>} : vector<16x128xbf16>, vector<128x32xbf16>, vector<16x32xf32> -> vector<16x32xf32>
    %c0_10 = arith.constant 0 : index
    %c0_11 = arith.constant 0 : index
    %56 = vector.load %arg4[%c0_10, %c0_11] : memref<16x32xf32, #tpu.memory_space<vmem>>, vector<16x32xf32>
    tpu.vector_store %arg4[%c0_10, %c0_11], %55 {strides = array<i32>} : memref<16x32xf32, #tpu.memory_space<vmem>>, vector<16x32xf32>,
    return
  }
  func.func @transform_0(%arg0: i32) -> (i32, i32) {
    %c0_i32 = arith.constant 0 : i32
    %c0_i32_0 = arith.constant 0 : i32
    return %arg0, %c0_i32 : i32, i32
  }
  func.func @transform_1(%arg0: i32) -> (i32, i32) {
    %c0_i32 = arith.constant 0 : i32
    %c0_i32_0 = arith.constant 0 : i32
    %c0_i32_1 = arith.constant 0 : i32
    return %c0_i32, %c0_i32_0 : i32, i32
  }
  func.func @transform_2(%arg0: i32) -> (i32, i32) {
    %c0_i32 = arith.constant 0 : i32
    %c0_i32_0 = arith.constant 0 : i32
    %c0_i32_1 = arith.constant 0 : i32
    return %c0_i32, %c0_i32_0 : i32, i32
  }
  func.func @transform_3(%arg0: i32) -> (i32, i32) {
    %c0_i32 = arith.constant 0 : i32
    %c0_i32_0 = arith.constant 0 : i32
    return %arg0, %c0_i32 : i32, i32
  }
}

</mosaic_0001>

<llo_original>
// kernel: tpu_custom_call.1
$region0: #{tpu_custom_call.1}
  #allocation0 [shape = 'u32[]', space=smem, size = 0x4, offset = 0x4, fixed_abs, tag = 'smem constant byte address 0x4 - core index']
  #allocation1 [shape = 'u32[72,128]{1,0:T(1,128)}', space=vmem, size = 0x9000, scoped, tag = 'internal scratch']
  %s0 = inlined_call_operand.vmem [shape: bf16[16,32], index: 0, kind: input, shape index: {}]
  %s1 = inlined_call_operand.vmem [shape: bf16[32,384], index: 1, kind: input, shape index: {}]
  %s2 = inlined_call_operand.vmem [shape: bf16[128,32], index: 2, kind: input, shape index: {}]
  %s3 = inlined_call_operand.hbm [shape: f32[16,32], index: 3, kind: output, shape index: {}]
  %s4 = sld [smem:[#allocation0]]
  $region22: #{tpu_custom_call.1} parent=0
    _
  %s6 = ssub.s32 1, %s4
  %s7 = scalar_select 0, %s6, %s4
  $region1: #{tpu_custom_call.1} parent=0
    #allocation2 [shape = 'u8[8192]{0}', space=vmem, size = 0x2000, scoped, tag = 'output window, operand 0, single buffered']
    #allocation3 [shape = 's32[1]{0}', space=sflag, size = 0x4, scoped, tag = 'scoped memory for tpu_custom_call.1']
    %8 = vsyncpa [#allocation3], 0
    // Predicated region
    $region2: #{tpu_custom_call.1} parent=1 // pred_check
      _
    $region3: #{tpu_custom_call.1} parent=1 // pred_check_branch
      %10 = sbr.rel (0) target = $region5
    $region4: #{tpu_custom_call.1} parent=1 // pred_region
      _
    $region5: #{tpu_custom_call.1} parent=1 // pred_fallthru
      _
    // Predicated region
    $region6: #{tpu_custom_call.1} parent=1 // pred_check
      _
    $region7: #{tpu_custom_call.1} parent=1 // pred_check_branch
      %12 = sbr.rel (0) target = $region9
    $region8: #{tpu_custom_call.1} parent=1 // pred_region
      _
    $region9: #{tpu_custom_call.1} parent=1 // pred_fallthru
      _
    // Predicated region
    $region10: #{tpu_custom_call.1} parent=1 // pred_check
      _
    $region11: #{tpu_custom_call.1} parent=1 // pred_check_branch
      %14 = sbr.rel (0) target = $region13
    $region12: #{tpu_custom_call.1} parent=1 // pred_region
      _
    $region13: #{tpu_custom_call.1} parent=1 // pred_fallthru
      _
    %v16 = vld [vmem:[%s0] sm:$0xf]
    %v17 = vld [vmem:[%s0 + $0x4] sm:$0xf]
    %v18 = vld [vmem:[%s1] sm:$0xff]
    %v19 = vld [vmem:[%s1 + $0x8] sm:$0xf]
    %v20 = vld [vmem:[%s1 + $0xc] sm:$0xff]
    %v21 = vld [vmem:[%s1 + $0x14] sm:$0xf]
    %v22 = vld [vmem:[%s1 + $0x18] sm:$0xff]
    %v23 = vld [vmem:[%s1 + $0x20] sm:$0xf]
    %v24 = vld [vmem:[%s1 + $0x24] sm:$0xff]
    %v25 = vld [vmem:[%s1 + $0x2c] sm:$0xf]
    %v28 = vunpack.c.l.b16 %v16
    %v29 = vunpack.c.l.b16 %v17
    %v30 = vpack.c.b16 %v29, %v28
    %v39 = vunpack.c.l.b16 %v18
    %v40 = vunpack.c.h.b16 %v18
    %v41 = vunpack.c.l.b16 %v19
    %v42 = vunpack.c.l.b16 %v20
    %v43 = vunpack.c.h.b16 %v20
    %v44 = vunpack.c.l.b16 %v21
    %v45 = vunpack.c.l.b16 %v22
    %v46 = vunpack.c.h.b16 %v22
    %v47 = vunpack.c.l.b16 %v23
    %v48 = vunpack.c.l.b16 %v24
    %v49 = vunpack.c.h.b16 %v24
    %v50 = vunpack.c.l.b16 %v25
    %v51 = vpack.c.b16 %v42, %v39
    %v52 = vpack.c.b16 %v43, %v40
    %v53 = vpack.c.b16 %v44, %v41
    %v54 = vpack.c.b16 %v48, %v45
    %v55 = vpack.c.b16 %v49, %v46
    %v56 = vpack.c.b16 %v50, %v47
    %vm63 = vcmask 261120
    %v65 = vsel %vm63, %v30, 0
    %67 = vmatpush.bf16.msra.mxu0 0
    %68 = vmatpush.bf16.msra.mxu0 0
    %69 = vmatpush.bf16.msra.mxu0 0
    %70 = vmatpush.bf16.msra.mxu0 0
    %71 = vmatpush.bf16.msra.mxu0 0
    %72 = vmatpush.bf16.msra.mxu0 0
    %73 = vmatpush.bf16.msra.mxu0 %v54
    %74 = vmatpush.bf16.msra.mxu0 %v51
    %75 = vmatmul.bf16.gmra.mxu0 %v65
    %v76 = vpop.f32.mrf.mxu0
    %v77 = vadd.f32 0.0, %v76
    %v78 = vpop.f32.mrf.mxu0
    %v79 = vadd.f32 0.0, %v78
    %80 = vdwg.mxu0
    %81 = vmatpush.bf16.msra.mxu0 0
    %82 = vmatpush.bf16.msra.mxu0 0
    %83 = vmatpush.bf16.msra.mxu0 0
    %84 = vmatpush.bf16.msra.mxu0 0
    %85 = vmatpush.bf16.msra.mxu0 0
    %86 = vmatpush.bf16.msra.mxu0 0
    %87 = vmatpush.bf16.msra.mxu0 %v55
    %88 = vmatpush.bf16.msra.mxu0 %v52
    %89 = vmatmul.bf16.gmra.mxu0 %v65
    %v90 = vpop.f32.mrf.mxu0
    %v91 = vadd.f32 0.0, %v90
    %v92 = vpop.f32.mrf.mxu0
    %v93 = vadd.f32 0.0, %v92
    %94 = vdwg.mxu0
    %95 = vmatpush.bf16.msra.mxu0 0
    %96 = vmatpush.bf16.msra.mxu0 0
    %97 = vmatpush.bf16.msra.mxu0 0
    %98 = vmatpush.bf16.msra.mxu0 0
    %99 = vmatpush.bf16.msra.mxu0 0
    %100 = vmatpush.bf16.msra.mxu0 0
    %101 = vmatpush.bf16.msra.mxu0 %v56
    %102 = vmatpush.bf16.msra.mxu0 %v53
    %103 = vmatmul.bf16.gmra.mxu0 %v65
    %v104 = vpop.f32.mrf.mxu0
    %v105 = vadd.f32 0.0, %v104
    %v106 = vpop.f32.mrf.mxu0
    %v107 = vadd.f32 0.0, %v106
    %108 = vdwg.mxu0
    %v109 = vpack.c.bf16 %v91, %v77
    %v110 = vpack.c.bf16 %v105, %v105
    %v111 = vpack.c.bf16 %v93, %v79
    %v112 = vpack.c.bf16 %v107, %v107
    %115 = vrot.lane.b32.xlu0 %v109, 96
    %v116 = vpop.permute.xlu0 %115
    %117 = vrot.lane.b32.xlu0 %v111, 96
    %v118 = vpop.permute.xlu0 %117
    %119 = vrot.lane.b32.xlu0 %v109, 64
    %v120 = vpop.permute.xlu0 %119
    %121 = vrot.lane.b32.xlu0 %v111, 64
    %v122 = vpop.permute.xlu0 %121
    %123 = vrot.lane.b32.xlu0 %v109, 32
    %v124 = vpop.permute.xlu0 %123
    %125 = vrot.lane.b32.xlu0 %v111, 32
    %v126 = vpop.permute.xlu0 %125
    %v127 = vrot.slane %v109, 4
    %v128 = vrot.slane %v111, 4
    %v129 = vrot.slane %v116, 4
    %v130 = vrot.slane %v118, 4
    %v131 = vrot.slane %v120, 4
    %v132 = vrot.slane %v122, 4
    %v133 = vrot.slane %v124, 4
    %v134 = vrot.slane %v126, 4
    %137 = vrot.lane.b32.xlu0 %v110, 96
    %v138 = vpop.permute.xlu0 %137
    %139 = vrot.lane.b32.xlu0 %v112, 96
    %v140 = vpop.permute.xlu0 %139
    %141 = vrot.lane.b32.xlu0 %v110, 64
    %v142 = vpop.permute.xlu0 %141
    %143 = vrot.lane.b32.xlu0 %v112, 64
    %v144 = vpop.permute.xlu0 %143
    %145 = vrot.lane.b32.xlu0 %v110, 32
    %v146 = vpop.permute.xlu0 %145
    %147 = vrot.lane.b32.xlu0 %v112, 32
    %v148 = vpop.permute.xlu0 %147
    %v150 = vsel %vm63, %v109, 0
    %v153 = vsel %vm63, %v127, 0
    %155 = vmatpush.bf16.xpose.msra.mxu0 0
    %156 = vmatpush.bf16.xpose.msra.mxu0 0
    %157 = vmatpush.bf16.xpose.msra.mxu0 0
    %158 = vmatpush.bf16.xpose.msra.mxu0 0
    %159 = vmatpush.bf16.xpose.msra.mxu0 0
    %160 = vmatpush.bf16.xpose.msra.mxu0 0
    %161 = vmatpush.bf16.xpose.msra.mxu0 0
    %162 = vmatpush.bf16.xpose.msra.mxu0 %v153
    %163 = vmatmul.bf16.gmra.mxu0 %v150
    %v164 = vpop.f32.mrf.mxu0
    %v165 = vadd.f32 0.0, %v164
    %v166 = vpop.f32.mrf.mxu0
    %167 = vdwg.mxu0
    %v169 = vsel %vm63, %v111, 0
    %v172 = vsel %vm63, %v128, 0
    %174 = vmatpush.bf16.xpose.msra.mxu0 0
    %175 = vmatpush.bf16.xpose.msra.mxu0 0
    %176 = vmatpush.bf16.xpose.msra.mxu0 0
    %177 = vmatpush.bf16.xpose.msra.mxu0 0
    %178 = vmatpush.bf16.xpose.msra.mxu0 0
    %179 = vmatpush.bf16.xpose.msra.mxu0 0
    %180 = vmatpush.bf16.xpose.msra.mxu0 0
    %181 = vmatpush.bf16.xpose.msra.mxu0 %v172
    %182 = vmatmul.bf16.gmra.mxu0 %v169
    %v183 = vpop.f32.mrf.mxu0
    %v184 = vadd.f32 0.0, %v183
    %v185 = vpop.f32.mrf.mxu0
    %186 = vdwg.mxu0
    %v188 = vsel %vm63, %v116, 0
    %v191 = vsel %vm63, %v129, 0
    %193 = vmatpush.bf16.xpose.msra.mxu0 0
    %194 = vmatpush.bf16.xpose.msra.mxu0 0
    %195 = vmatpush.bf16.xpose.msra.mxu0 0
    %196 = vmatpush.bf16.xpose.msra.mxu0 0
    %197 = vmatpush.bf16.xpose.msra.mxu0 0
    %198 = vmatpush.bf16.xpose.msra.mxu0 0
    %199 = vmatpush.bf16.xpose.msra.mxu0 0
    %200 = vmatpush.bf16.xpose.msra.mxu0 %v191
    %201 = vmatmul.bf16.gmra.mxu0 %v188
    %v202 = vpop.f32.mrf.mxu0
    %v203 = vadd.f32 0.0, %v202
    %v204 = vpop.f32.mrf.mxu0
    %205 = vdwg.mxu0
    %v207 = vsel %vm63, %v118, 0
    %v210 = vsel %vm63, %v130, 0
    %212 = vmatpush.bf16.xpose.msra.mxu0 0
    %213 = vmatpush.bf16.xpose.msra.mxu0 0
    %214 = vmatpush.bf16.xpose.msra.mxu0 0
    %215 = vmatpush.bf16.xpose.msra.mxu0 0
    %216 = vmatpush.bf16.xpose.msra.mxu0 0
    %217 = vmatpush.bf16.xpose.msra.mxu0 0
    %218 = vmatpush.bf16.xpose.msra.mxu0 0
    %219 = vmatpush.bf16.xpose.msra.mxu0 %v210
    %220 = vmatmul.bf16.gmra.mxu0 %v207
    %v221 = vpop.f32.mrf.mxu0
    %v222 = vadd.f32 0.0, %v221
    %v223 = vpop.f32.mrf.mxu0
    %224 = vdwg.mxu0
    %v226 = vsel %vm63, %v120, 0
    %v229 = vsel %vm63, %v131, 0
    %231 = vmatpush.bf16.xpose.msra.mxu0 0
    %232 = vmatpush.bf16.xpose.msra.mxu0 0
    %233 = vmatpush.bf16.xpose.msra.mxu0 0
    %234 = vmatpush.bf16.xpose.msra.mxu0 0
    %235 = vmatpush.bf16.xpose.msra.mxu0 0
    %236 = vmatpush.bf16.xpose.msra.mxu0 0
    %237 = vmatpush.bf16.xpose.msra.mxu0 0
    %238 = vmatpush.bf16.xpose.msra.mxu0 %v229
    %239 = vmatmul.bf16.gmra.mxu0 %v226
    %v240 = vpop.f32.mrf.mxu0
    %v241 = vadd.f32 0.0, %v240
    %v242 = vpop.f32.mrf.mxu0
    %243 = vdwg.mxu0
    %v245 = vsel %vm63, %v122, 0
    %v248 = vsel %vm63, %v132, 0
    %250 = vmatpush.bf16.xpose.msra.mxu0 0
    %251 = vmatpush.bf16.xpose.msra.mxu0 0
    %252 = vmatpush.bf16.xpose.msra.mxu0 0
    %253 = vmatpush.bf16.xpose.msra.mxu0 0
    %254 = vmatpush.bf16.xpose.msra.mxu0 0
    %255 = vmatpush.bf16.xpose.msra.mxu0 0
    %256 = vmatpush.bf16.xpose.msra.mxu0 0
    %257 = vmatpush.bf16.xpose.msra.mxu0 %v248
    %258 = vmatmul.bf16.gmra.mxu0 %v245
    %v259 = vpop.f32.mrf.mxu0
    %v260 = vadd.f32 0.0, %v259
    %v261 = vpop.f32.mrf.mxu0
    %262 = vdwg.mxu0
    %v264 = vsel %vm63, %v124, 0
    %v267 = vsel %vm63, %v133, 0
    %269 = vmatpush.bf16.xpose.msra.mxu0 0
    %270 = vmatpush.bf16.xpose.msra.mxu0 0
    %271 = vmatpush.bf16.xpose.msra.mxu0 0
    %272 = vmatpush.bf16.xpose.msra.mxu0 0
    %273 = vmatpush.bf16.xpose.msra.mxu0 0
    %274 = vmatpush.bf16.xpose.msra.mxu0 0
    %275 = vmatpush.bf16.xpose.msra.mxu0 0
    %276 = vmatpush.bf16.xpose.msra.mxu0 %v267
    %277 = vmatmul.bf16.gmra.mxu0 %v264
    %v278 = vpop.f32.mrf.mxu0
    %v279 = vadd.f32 0.0, %v278
    %v280 = vpop.f32.mrf.mxu0
    %281 = vdwg.mxu0
    %v283 = vsel %vm63, %v126, 0
    %v286 = vsel %vm63, %v134, 0
    %288 = vmatpush.bf16.xpose.msra.mxu0 0
    %289 = vmatpush.bf16.xpose.msra.mxu0 0
    %290 = vmatpush.bf16.xpose.msra.mxu0 0
    %291 = vmatpush.bf16.xpose.msra.mxu0 0
    %292 = vmatpush.bf16.xpose.msra.mxu0 0
    %293 = vmatpush.bf16.xpose.msra.mxu0 0
    %294 = vmatpush.bf16.xpose.msra.mxu0 0
    %295 = vmatpush.bf16.xpose.msra.mxu0 %v286
    %296 = vmatmul.bf16.gmra.mxu0 %v283
    %v297 = vpop.f32.mrf.mxu0
    %v298 = vadd.f32 0.0, %v297
    %v299 = vpop.f32.mrf.mxu0
    %300 = vdwg.mxu0
    %vm301 = vcmask 64512
    %v302 = vsel %vm301, %v165, -inf
    %303 = vmax.xlane.f32.xlu0 %v302
    %v304 = vpop.xlane.xlu0 %303
    %v305 = vsel %vm301, %v184, -inf
    %306 = vmax.xlane.f32.xlu0 %v305
    %v307 = vpop.xlane.xlu0 %306
    %v308 = vsel %vm301, %v203, -inf
    %309 = vmax.xlane.f32.xlu0 %v308
    %v310 = vpop.xlane.xlu0 %309
    %v311 = vsel %vm301, %v222, -inf
    %312 = vmax.xlane.f32.xlu0 %v311
    %v313 = vpop.xlane.xlu0 %312
    %v314 = vsel %vm301, %v241, -inf
    %315 = vmax.xlane.f32.xlu0 %v314
    %v316 = vpop.xlane.xlu0 %315
    %v317 = vsel %vm301, %v260, -inf
    %318 = vmax.xlane.f32.xlu0 %v317
    %v319 = vpop.xlane.xlu0 %318
    %v320 = vsel %vm301, %v279, -inf
    %321 = vmax.xlane.f32.xlu0 %v320
    %v322 = vpop.xlane.xlu0 %321
    %v323 = vsel %vm301, %v298, -inf
    %324 = vmax.xlane.f32.xlu0 %v323
    %v325 = vpop.xlane.xlu0 %324
    %v326 = vsub.f32 %v165, %v304
    %v327 = vsub.f32 %v184, %v307
    %v328 = vsub.f32 %v203, %v310
    %v329 = vsub.f32 %v222, %v313
    %v330 = vsub.f32 %v241, %v316
    %v331 = vsub.f32 %v260, %v319
    %v332 = vsub.f32 %v279, %v322
    %v333 = vsub.f32 %v298, %v325
    %v334 = vmul.f32 %v326, 1.442695
    %v335 = vpow.pop %v334
    %v336 = vmul.f32 %v327, 1.442695
    %v337 = vpow.pop %v336
    %v338 = vmul.f32 %v328, 1.442695
    %v339 = vpow.pop %v338
    %v340 = vmul.f32 %v329, 1.442695
    %v341 = vpow.pop %v340
    %v342 = vmul.f32 %v330, 1.442695
    %v343 = vpow.pop %v342
    %v344 = vmul.f32 %v331, 1.442695
    %v345 = vpow.pop %v344
    %v346 = vmul.f32 %v332, 1.442695
    %v347 = vpow.pop %v346
    %v348 = vmul.f32 %v333, 1.442695
    %v349 = vpow.pop %v348
    %v350 = vsel %vm301, %v335, 0.0
    %351 = vadd.xlane.f32.xlu0 %v350
    %v352 = vpop.xlane.xlu0 %351
    %v353 = vsel %vm301, %v337, 0.0
    %354 = vadd.xlane.f32.xlu0 %v353
    %v355 = vpop.xlane.xlu0 %354
    %v356 = vsel %vm301, %v339, 0.0
    %357 = vadd.xlane.f32.xlu0 %v356
    %v358 = vpop.xlane.xlu0 %357
    %v359 = vsel %vm301, %v341, 0.0
    %360 = vadd.xlane.f32.xlu0 %v359
    %v361 = vpop.xlane.xlu0 %360
    %v362 = vsel %vm301, %v343, 0.0
    %363 = vadd.xlane.f32.xlu0 %v362
    %v364 = vpop.xlane.xlu0 %363
    %v365 = vsel %vm301, %v345, 0.0
    %366 = vadd.xlane.f32.xlu0 %v365
    %v367 = vpop.xlane.xlu0 %366
    %v368 = vsel %vm301, %v347, 0.0
    %369 = vadd.xlane.f32.xlu0 %v368
    %v370 = vpop.xlane.xlu0 %369
    %v371 = vsel %vm301, %v349, 0.0
    %372 = vadd.xlane.f32.xlu0 %v371
    %v373 = vpop.xlane.xlu0 %372
    %v374 = vpack.c.bf16 %v335, %v335
    %v375 = vpack.c.bf16 %v337, %v337
    %v376 = vpack.c.bf16 %v339, %v339
    %v377 = vpack.c.bf16 %v341, %v341
    %v378 = vpack.c.bf16 %v343, %v343
    %v379 = vpack.c.bf16 %v345, %v345
    %v380 = vpack.c.bf16 %v347, %v347
    %v381 = vpack.c.bf16 %v349, %v349
    %v383 = vsel %vm301, %v374, 0
    %vm385 = vcmask 1043456
    %v387 = vsel %vm385, %v110, 0
    %389 = vmatpush.bf16.msra.mxu0 0
    %390 = vmatpush.bf16.msra.mxu0 0
    %391 = vmatpush.bf16.msra.mxu0 0
    %392 = vmatpush.bf16.msra.mxu0 0
    %393 = vmatpush.bf16.msra.mxu0 0
    %394 = vmatpush.bf16.msra.mxu0 0
    %395 = vmatpush.bf16.msra.mxu0 0
    %396 = vmatpush.bf16.msra.mxu0 %v387
    %397 = vmatmul.bf16.gmra.mxu0 %v383
    %v398 = vpop.f32.mrf.mxu0
    %v399 = vadd.f32 0.0, %v398
    %v400 = vpop.f32.mrf.mxu0
    %401 = vdwg.mxu0
    %v403 = vsel %vm301, %v375, 0
    %v406 = vsel %vm385, %v112, 0
    %408 = vmatpush.bf16.msra.mxu0 0
    %409 = vmatpush.bf16.msra.mxu0 0
    %410 = vmatpush.bf16.msra.mxu0 0
    %411 = vmatpush.bf16.msra.mxu0 0
    %412 = vmatpush.bf16.msra.mxu0 0
    %413 = vmatpush.bf16.msra.mxu0 0
    %414 = vmatpush.bf16.msra.mxu0 0
    %415 = vmatpush.bf16.msra.mxu0 %v406
    %416 = vmatmul.bf16.gmra.mxu0 %v403
    %v417 = vpop.f32.mrf.mxu0
    %v418 = vadd.f32 0.0, %v417
    %v419 = vpop.f32.mrf.mxu0
    %420 = vdwg.mxu0
    %v422 = vsel %vm301, %v376, 0
    %v425 = vsel %vm385, %v138, 0
    %427 = vmatpush.bf16.msra.mxu0 0
    %428 = vmatpush.bf16.msra.mxu0 0
    %429 = vmatpush.bf16.msra.mxu0 0
    %430 = vmatpush.bf16.msra.mxu0 0
    %431 = vmatpush.bf16.msra.mxu0 0
    %432 = vmatpush.bf16.msra.mxu0 0
    %433 = vmatpush.bf16.msra.mxu0 0
    %434 = vmatpush.bf16.msra.mxu0 %v425
    %435 = vmatmul.bf16.gmra.mxu0 %v422
    %v436 = vpop.f32.mrf.mxu0
    %v437 = vadd.f32 0.0, %v436
    %v438 = vpop.f32.mrf.mxu0
    %439 = vdwg.mxu0
    %v441 = vsel %vm301, %v377, 0
    %v444 = vsel %vm385, %v140, 0
    %446 = vmatpush.bf16.msra.mxu0 0
    %447 = vmatpush.bf16.msra.mxu0 0
    %448 = vmatpush.bf16.msra.mxu0 0
    %449 = vmatpush.bf16.msra.mxu0 0
    %450 = vmatpush.bf16.msra.mxu0 0
    %451 = vmatpush.bf16.msra.mxu0 0
    %452 = vmatpush.bf16.msra.mxu0 0
    %453 = vmatpush.bf16.msra.mxu0 %v444
    %454 = vmatmul.bf16.gmra.mxu0 %v441
    %v455 = vpop.f32.mrf.mxu0
    %v456 = vadd.f32 0.0, %v455
    %v457 = vpop.f32.mrf.mxu0
    %458 = vdwg.mxu0
    %v460 = vsel %vm301, %v378, 0
    %v463 = vsel %vm385, %v142, 0
    %465 = vmatpush.bf16.msra.mxu0 0
    %466 = vmatpush.bf16.msra.mxu0 0
    %467 = vmatpush.bf16.msra.mxu0 0
    %468 = vmatpush.bf16.msra.mxu0 0
    %469 = vmatpush.bf16.msra.mxu0 0
    %470 = vmatpush.bf16.msra.mxu0 0
    %471 = vmatpush.bf16.msra.mxu0 0
    %472 = vmatpush.bf16.msra.mxu0 %v463
    %473 = vmatmul.bf16.gmra.mxu0 %v460
    %v474 = vpop.f32.mrf.mxu0
    %v475 = vadd.f32 0.0, %v474
    %v476 = vpop.f32.mrf.mxu0
    %477 = vdwg.mxu0
    %v479 = vsel %vm301, %v379, 0
    %v482 = vsel %vm385, %v144, 0
    %484 = vmatpush.bf16.msra.mxu0 0
    %485 = vmatpush.bf16.msra.mxu0 0
    %486 = vmatpush.bf16.msra.mxu0 0
    %487 = vmatpush.bf16.msra.mxu0 0
    %488 = vmatpush.bf16.msra.mxu0 0
    %489 = vmatpush.bf16.msra.mxu0 0
    %490 = vmatpush.bf16.msra.mxu0 0
    %491 = vmatpush.bf16.msra.mxu0 %v482
    %492 = vmatmul.bf16.gmra.mxu0 %v479
    %v493 = vpop.f32.mrf.mxu0
    %v494 = vadd.f32 0.0, %v493
    %v495 = vpop.f32.mrf.mxu0
    %496 = vdwg.mxu0
    %v498 = vsel %vm301, %v380, 0
    %v501 = vsel %vm385, %v146, 0
    %503 = vmatpush.bf16.msra.mxu0 0
    %504 = vmatpush.bf16.msra.mxu0 0
    %505 = vmatpush.bf16.msra.mxu0 0
    %506 = vmatpush.bf16.msra.mxu0 0
    %507 = vmatpush.bf16.msra.mxu0 0
    %508 = vmatpush.bf16.msra.mxu0 0
    %509 = vmatpush.bf16.msra.mxu0 0
    %510 = vmatpush.bf16.msra.mxu0 %v501
    %511 = vmatmul.bf16.gmra.mxu0 %v498
    %v512 = vpop.f32.mrf.mxu0
    %v513 = vadd.f32 0.0, %v512
    %v514 = vpop.f32.mrf.mxu0
    %515 = vdwg.mxu0
    %v517 = vsel %vm301, %v381, 0
    %v520 = vsel %vm385, %v148, 0
    %522 = vmatpush.bf16.msra.mxu0 0
    %523 = vmatpush.bf16.msra.mxu0 0
    %524 = vmatpush.bf16.msra.mxu0 0
    %525 = vmatpush.bf16.msra.mxu0 0
    %526 = vmatpush.bf16.msra.mxu0 0
    %527 = vmatpush.bf16.msra.mxu0 0
    %528 = vmatpush.bf16.msra.mxu0 0
    %529 = vmatpush.bf16.msra.mxu0 %v520
    %530 = vmatmul.bf16.gmra.mxu0 %v517
    %v531 = vpop.f32.mrf.mxu0
    %v532 = vadd.f32 0.0, %v531
    %v533 = vpop.f32.mrf.mxu0
    %534 = vdwg.mxu0
    %v535 = vrcp.pop %v352
    %v536 = vrcp.pop %v355
    %v537 = vrcp.pop %v358
    %v538 = vrcp.pop %v361
    %v539 = vrcp.pop %v364
    %v540 = vrcp.pop %v367
    %v541 = vrcp.pop %v370
    %v542 = vrcp.pop %v373
    %v543 = vmul.f32 %v399, %v535
    %v544 = vmul.f32 %v418, %v536
    %v545 = vmul.f32 %v437, %v537
    %v546 = vmul.f32 %v456, %v538
    %v547 = vmul.f32 %v475, %v539
    %v548 = vmul.f32 %v494, %v540
    %v549 = vmul.f32 %v513, %v541
    %v550 = vmul.f32 %v532, %v542
    %553 = vrot.lane.b32.xlu0 %v545, 32
    %v554 = vpop.permute.xlu0 %553
    %555 = vrot.lane.b32.xlu0 %v546, 32
    %v556 = vpop.permute.xlu0 %555
    %561 = vrot.lane.b32.xlu0 %v547, 64
    %v562 = vpop.permute.xlu0 %561
    %563 = vrot.lane.b32.xlu0 %v548, 64
    %v564 = vpop.permute.xlu0 %563
    %569 = vrot.lane.b32.xlu0 %v549, 96
    %v570 = vpop.permute.xlu0 %569
    %571 = vrot.lane.b32.xlu0 %v550, 96
    %v572 = vpop.permute.xlu0 %571
    %v575 = vsel %vm63, %v543, %v554
    %v576 = vsel %vm63, %v544, %v556
    %vm577 = vcmask 523264
    %v578 = vsel %vm577, %v575, %v562
    %v579 = vsel %vm577, %v576, %v564
    %vm580 = vcmask 785408
    %v581 = vsel %vm580, %v578, %v570
    %v582 = vsel %vm580, %v579, %v572
    %v583 = vpack.c.bf16 %v582, %v581
    %v584 = vld [vmem:[%s2] sm:$0xf]
    %v585 = vld [vmem:[%s2 + $0x4] sm:$0xf]
    %v586 = vld [vmem:[%s2 + $0x8] sm:$0xf]
    %v587 = vld [vmem:[%s2 + $0xc] sm:$0xf]
    %v588 = vld [vmem:[%s2 + $0x10] sm:$0xf]
    %v589 = vld [vmem:[%s2 + $0x14] sm:$0xf]
    %v590 = vld [vmem:[%s2 + $0x18] sm:$0xf]
    %v591 = vld [vmem:[%s2 + $0x1c] sm:$0xf]
    %v592 = vld [vmem:[%s2 + $0x20] sm:$0xf]
    %v593 = vld [vmem:[%s2 + $0x24] sm:$0xf]
    %v594 = vld [vmem:[%s2 + $0x28] sm:$0xf]
    %v595 = vld [vmem:[%s2 + $0x2c] sm:$0xf]
    %v596 = vld [vmem:[%s2 + $0x30] sm:$0xf]
    %v597 = vld [vmem:[%s2 + $0x34] sm:$0xf]
    %v598 = vld [vmem:[%s2 + $0x38] sm:$0xf]
    %v599 = vld [vmem:[%s2 + $0x3c] sm:$0xf]
    %v616 = vunpack.c.l.b16 %v584
    %v617 = vunpack.c.l.b16 %v585
    %v618 = vunpack.c.l.b16 %v586
    %v619 = vunpack.c.l.b16 %v587
    %v620 = vunpack.c.l.b16 %v588
    %v621 = vunpack.c.l.b16 %v589
    %v622 = vunpack.c.l.b16 %v590
    %v623 = vunpack.c.l.b16 %v591
    %v624 = vunpack.c.l.b16 %v592
    %v625 = vunpack.c.l.b16 %v593
    %v626 = vunpack.c.l.b16 %v594
    %v627 = vunpack.c.l.b16 %v595
    %v628 = vunpack.c.l.b16 %v596
    %v629 = vunpack.c.l.b16 %v597
    %v630 = vunpack.c.l.b16 %v598
    %v631 = vunpack.c.l.b16 %v599
    %v632 = vpack.c.b16 %v617, %v616
    %v633 = vpack.c.b16 %v619, %v618
    %v634 = vpack.c.b16 %v621, %v620
    %v635 = vpack.c.b16 %v623, %v622
    %v636 = vpack.c.b16 %v625, %v624
    %v637 = vpack.c.b16 %v627, %v626
    %v638 = vpack.c.b16 %v629, %v628
    %v639 = vpack.c.b16 %v631, %v630
    %648 = vmatpush.bf16.msra.mxu0 %v639
    %649 = vmatpush.bf16.msra.mxu0 %v638
    %650 = vmatpush.bf16.msra.mxu0 %v637
    %651 = vmatpush.bf16.msra.mxu0 %v636
    %652 = vmatpush.bf16.msra.mxu0 %v635
    %653 = vmatpush.bf16.msra.mxu0 %v634
    %654 = vmatpush.bf16.msra.mxu0 %v633
    %655 = vmatpush.bf16.msra.mxu0 %v632
    %656 = vmatmul.bf16.gmra.mxu0 %v583
    %v657 = vpop.f32.mrf.mxu0
    %v658 = vadd.f32 0.0, %v657
    %v659 = vpop.f32.mrf.mxu0
    %v660 = vadd.f32 0.0, %v659
    %661 = vdwg.mxu0
    %662 = vst.msk [vmem:[#allocation2] sm:$0xff] %vm63, %v658
    %663 = vst.msk [vmem:[#allocation2 + $0x8] sm:$0xff] %vm63, %v660
    // Predicated region
    $region14: #{tpu_custom_call.1} parent=1 // pred_check
      _
    $region15: #{tpu_custom_call.1} parent=1 // pred_check_branch
      %665 = sbr.rel (0) target = $region17
    $region16: #{tpu_custom_call.1} parent=1 // pred_region
      %667 = vsyncadd [#allocation3], 0
      %s668 = sshll.u32 [#allocation2], 4
      %s669 = int_to_ptr.vmem [resolvable:$true] %s668
      %s670 = sshll.u32 %s3, 4
      %s671 = int_to_ptr.hbm [resolvable:$true] %s670
      %676 = dma.vmem_to_hbm [thread:$0]  %s669, 256, %s671, [#allocation3], 128, 128, 8
    $region17: #{tpu_custom_call.1} parent=1 // pred_fallthru
      _
    // Predicated region
    $region18: #{tpu_custom_call.1} parent=1 // pred_check
      _
    $region19: #{tpu_custom_call.1} parent=1 // pred_check_branch
      %678 = sbr.rel (0) target = $region21
    $region20: #{tpu_custom_call.1} parent=1 // pred_region
      %680 = dma.done [#allocation3], 256
    $region21: #{tpu_custom_call.1} parent=1 // pred_fallthru
      _
    %681 = vsyncpa [#allocation3], 1

</llo_original>
